<compile_context>
chip_gen: v5e
topology: v5e:2x2
jax: 0.10.0
libtpu: 0.0.40
codegen_flags: <defaults>
</compile_context>

<pallas_src>
import jax
import jax.numpy as jnp
from jax.experimental import pallas as pl
from jax.experimental.pallas import tpu as pltpu


def _self_attention_kernel(x_ref, w1_ref, b1_ref, w2_ref, b2_ref,
                           out_ref, wts_ref):
    # x_ref block: (TB, S, H) -- TB batch rows per grid step.
    TB, S, H = x_ref.shape
    P = w1_ref.shape[1]

    x = x_ref[...]                                      # (TB, S, H), native dtype

    # --- Linear(H, P) + ReLU: one large MXU matmul over all TB*S rows ---
    # For S % 8 == 0 the reshape is layout-preserving (free); otherwise it
    # costs one in-VMEM retile copy but remains correct.
    h = jnp.dot(x.reshape(TB * S, H), w1_ref[...],
                preferred_element_type=jnp.float32)     # (TB*S, P), f32 accum
    h = jnp.maximum(h + b1_ref[...], 0.0).reshape(TB, S, P)

    # --- Linear(P, 1): VPU multiply + lane reduce (avoid an N=1 MXU matmul) ---
    energy = jnp.sum(h * w2_ref[...][None, :, :], axis=-1) + b2_ref[0, 0]  # (TB, S)

    # --- softmax over the sequence axis (f32, exact division) ---
    m = jnp.max(energy, axis=-1, keepdims=True)         # (TB, 1)
    e = jnp.exp(energy - m)
    w = e / jnp.sum(e, axis=-1, keepdims=True)          # (TB, S), f32

    # --- weighted sum over S: elementwise multiply (f32) + sublane reduce ---
    # Yields (TB, H) directly; no (TB,1,H) intermediate and no squeeze.
    pooled = jnp.sum(x * w[:, :, None], axis=1)         # (TB, H), f32

    out_ref[...] = pooled.astype(out_ref.dtype)         # (TB, H)
    wts_ref[...] = w.astype(wts_ref.dtype)              # (TB, S)


def _device_params():
    """Generation-aware tiling/VMEM policy. Falls back to safe defaults."""
    try:
        kind = jax.devices()[0].device_kind.lower()
    except Exception:
        kind = ""
    if "v5 lite" in kind or "v5e" in kind or "v5litepod" in kind:
        # 1 TC, 128 MiB physical VMEM, ~0.8 TB/s HBM.
        return dict(budget=40 << 20, target_tile_bytes=4 << 20,
                    num_tc=1, vmem_cap=96 << 20)
    if "v6" in kind:
        # 1 TC, 128 MiB physical VMEM, ~1.4 TB/s HBM.
        return dict(budget=48 << 20, target_tile_bytes=4 << 20,
                    num_tc=1, vmem_cap=96 << 20)
    if "tpu7" in kind or "v7" in kind or " 7x" in kind:
        # 2 TCs/chip, 64 MiB VMEM per TC, ~3.2 TB/s HBM.
        return dict(budget=20 << 20, target_tile_bytes=6 << 20,
                    num_tc=2, vmem_cap=48 << 20)
    return dict(budget=24 << 20, target_tile_bytes=2 << 20,
                num_tc=1, vmem_cap=64 << 20)


def _pick_batch_tile(B, S, H, P, itemsize, params):
    """TB = batch rows per block: sublane-aligned, sized from a VMEM/roofline
    budget, >= 2 grid steps only on multi-TensorCore chips."""
    sublane = {4: 8, 2: 16, 1: 32}.get(itemsize, 8)

    x_row = S * H * itemsize                           # x tile bytes per batch row
    # per-row VMEM: double-buffered x + outputs, single-instance f32 temps.
    per_row = 2 * x_row + 2 * (H + S) * itemsize + S * P * 4 + (2 * S + H) * 4

    cap = max(1, params["budget"] // max(per_row, 1))
    want = max(1, params["target_tile_bytes"] // max(x_row, 1))
    tb = min(cap, want)

    # Multi-TC chips: keep >= 2 grid steps so both cores get work.
    if params["num_tc"] >= 2 and B >= 2 * sublane:
        half = -(-B // 2)
        tb = min(tb, max(sublane, (half // sublane) * sublane))

    tb = max(sublane, (tb // sublane) * sublane)       # sublane-aligned
    b_ceil = -(-B // sublane) * sublane                # don't tile beyond padded batch
    return min(tb, b_ceil)


def _vmem_limit(TB, S, H, P, itemsize, params):
    """Derive vmem_limit_bytes from the chosen TB with ~25% headroom."""
    x_tile = TB * S * H * itemsize
    out_tiles = TB * (H + S) * itemsize
    temps = TB * S * P * 4 + TB * (2 * S + H) * 4
    param_bytes = H * P * itemsize + 3 * P * 4 + 128
    total = 2 * x_tile + 2 * out_tiles + temps + param_bytes
    total = int(total * 1.25) + (2 << 20)
    return int(min(max(total, 16 << 20), params["vmem_cap"]))


def self_attention(x, w1, b1, w2, b2):
    """x: (B, S, H). w1: (H, P), b1: (1, P), w2: (P, 1), b2: (1, 1).
    Returns (outputs (B, H), weights (B, S))."""
    B, S, H = x.shape
    P = w1.shape[1]
    dtype = x.dtype
    itemsize = dtype.itemsize

    params = _device_params()
    TB = _pick_batch_tile(B, S, H, P, itemsize, params)

    # Zero-pad the batch to a multiple of TB (padded rows are sliced off below;
    # zeros produce finite energies so no NaNs leak in).
    B_pad = ((B + TB - 1) // TB) * TB
    x_in = x if B_pad == B else jnp.pad(x, ((0, B_pad - B), (0, 0), (0, 0)))

    w1_c = w1.astype(dtype)                        # native-precision MXU path
    b1_f = b1.reshape(1, P).astype(jnp.float32)    # added to f32 accumulator
    w2_row = w2.reshape(1, P).astype(jnp.float32)  # lane-dense row, VPU reduce
    b2_s = b2.reshape(1, 1).astype(jnp.float32)    # scalar -> SMEM

    grid = (B_pad // TB,)
    out_shape = (
        jax.ShapeDtypeStruct((B_pad, H), dtype),
        jax.ShapeDtypeStruct((B_pad, S), dtype),
    )

    outputs, weights = pl.pallas_call(
        _self_attention_kernel,
        grid=grid,
        in_specs=[
            pl.BlockSpec((TB, S, H), lambda b: (b, 0, 0)),   # x: TB batch rows
            pl.BlockSpec((H, P), lambda b: (0, 0)),          # W1 (full)
            pl.BlockSpec((1, P), lambda b: (0, 0)),          # b1 (full)
            pl.BlockSpec((1, P), lambda b: (0, 0)),          # W2 as a row
            pl.BlockSpec(memory_space=pltpu.MemorySpace.SMEM),  # b2 scalar
        ],
        out_specs=(
            pl.BlockSpec((TB, H), lambda b: (b, 0)),         # pooled
            pl.BlockSpec((TB, S), lambda b: (b, 0)),         # weights (lane-dense)
        ),
        out_shape=out_shape,
        compiler_params=pltpu.CompilerParams(
            dimension_semantics=("parallel",),
            vmem_limit_bytes=_vmem_limit(TB, S, H, P, itemsize, params),
        ),
    )(x_in, w1_c, b1_f, w2_row, b2_s)

    return outputs[:B], weights[:B]


def _reference(x, w1, b1, w2, b2):
    h = jnp.maximum(jnp.einsum("bsh,hp->bsp", x, w1) + b1[0], 0.0)
    energy = jnp.einsum("bsp,po->bso", h, w2) + b2[0]          # (B, S, 1)
    weights = jax.nn.softmax(energy[..., 0], axis=1)           # (B, S)
    outputs = jnp.sum(x * weights[..., None], axis=1)          # (B, H)
    return outputs, weights


if __name__ == "__main__":
    B, S, H, P = 2, 8, 32, 64

    key = jax.random.PRNGKey(0)
    kx, k1, k2, k3, k4 = jax.random.split(key, 5)

    x = jax.random.normal(kx, (B, S, H), dtype=jnp.float32)
    # parameter shapes from nn.Linear(H, 64) and nn.Linear(64, 1)
    w1 = jax.random.normal(k1, (H, P), dtype=jnp.float32) * 0.1
    b1 = jax.random.normal(k2, (1, P), dtype=jnp.float32) * 0.1
    w2 = jax.random.normal(k3, (P, 1), dtype=jnp.float32) * 0.1
    b2 = jax.random.normal(k4, (1, 1), dtype=jnp.float32) * 0.1

    outputs, weights = self_attention(x, w1, b1, w2, b2)
    jax.block_until_ready((outputs, weights))

    ref_out, ref_w = _reference(x, w1, b1, w2, b2)
    assert outputs.shape == (B, H) and weights.shape == (B, S)
    assert jnp.allclose(outputs, ref_out, atol=1e-5, rtol=1e-5)
    assert jnp.allclose(weights, ref_w, atol=1e-5, rtol=1e-5)

    print("KERNEL_OK")
</pallas_src>

<mosaic_0001>
module attributes {stable_mosaic.version = 11 : i64} {
  func.func @_self_attention_kernel(%arg0: i32, %arg1: memref<8x8x32xf32, #tpu.memory_space<vmem>>, %arg2: memref<32x64xf32, #tpu.memory_space<vmem>>, %arg3: memref<1x64xf32, #tpu.memory_space<vmem>>, %arg4: memref<1x64xf32, #tpu.memory_space<vmem>>, %arg5: memref<1x1xf32, #tpu.memory_space<smem>>, %arg6: memref<8x32xf32, #tpu.memory_space<vmem>>, %arg7: memref<8x8xf32, #tpu.memory_space<vmem>>) attributes {dimension_semantics = [#tpu.dimension_semantics<parallel>], iteration_bounds = array<i64: 1>, scalar_prefetch = 0 : i64, scratch_operands = 0 : i64, tpu.core_type = #tpu.core_type<tc>, window_params = [{transform_indices = @transform_0, window_bounds = array<i64: 8, 8, 32>}, {pipeline_mode = #tpu.pipeline_mode<synchronous>, transform_indices = @transform_1, window_bounds = array<i64: 32, 64>}, {pipeline_mode = #tpu.pipeline_mode<synchronous>, transform_indices = @transform_2, window_bounds = array<i64: 1, 64>}, {pipeline_mode = #tpu.pipeline_mode<synchronous>, transform_indices = @transform_3, window_bounds = array<i64: 1, 64>}, {transform_indices = @transform_4, window_bounds = array<i64: 1, 1>}, {transform_indices = @transform_5, window_bounds = array<i64: 8, 32>}, {transform_indices = @transform_6, window_bounds = array<i64: 8, 8>}]} {
    %c0 = arith.constant 0 : index
    %c0_0 = arith.constant 0 : index
    %c0_1 = arith.constant 0 : index
    %0 = vector.load %arg1[%c0, %c0_0, %c0_1] : memref<8x8x32xf32, #tpu.memory_space<vmem>>, vector<8x8x32xf32>
    %1 = vector.shape_cast %0 : vector<8x8x32xf32> to vector<64x32xf32>
    %c0_2 = arith.constant 0 : index
    %c0_3 = arith.constant 0 : index
    %2 = vector.load %arg2[%c0_2, %c0_3] : memref<32x64xf32, #tpu.memory_space<vmem>>, vector<32x64xf32>
    %cst = arith.constant dense<0.000000e+00> : vector<64x64xf32>
    %3 = tpu.matmul %1, %2, %cst {dimension_numbers = #tpu.dot_dimension_numbers<[1], [0], [0], [1], [0, 0, 1, 1], [], []>} : vector<64x32xf32>, vector<32x64xf32>, vector<64x64xf32> -> vector<64x64xf32>
    %c0_4 = arith.constant 0 : index
    %c0_5 = arith.constant 0 : index
    %4 = vector.load %arg3[%c0_4, %c0_5] : memref<1x64xf32, #tpu.memory_space<vmem>>, vector<1x64xf32>
    %5 = vector.broadcast %4 : vector<1x64xf32> to vector<64x64xf32>
    %6 = arith.addf %3, %5 : vector<64x64xf32>
    %cst_6 = arith.constant 0.000000e+00 : f32
    %7 = vector.broadcast %cst_6 : f32 to vector<64x64xf32>
    %8 = arith.maximumf %6, %7 : vector<64x64xf32>
    %9 = vector.shape_cast %8 : vector<64x64xf32> to vector<8x8x64xf32>
    %c0_7 = arith.constant 0 : index
    %c0_8 = arith.constant 0 : index
    %10 = vector.load %arg4[%c0_7, %c0_8] : memref<1x64xf32, #tpu.memory_space<vmem>>, vector<1x64xf32>
    %11 = vector.shape_cast %10 : vector<1x64xf32> to vector<1x1x64xf32>
    %12 = vector.broadcast %11 : vector<1x1x64xf32> to vector<8x8x64xf32>
    %13 = arith.mulf %9, %12 : vector<8x8x64xf32>
    %cst_9 = arith.constant dense<0.000000e+00> : vector<8x8xf32>
    %14 = vector.multi_reduction <add>, %13, %cst_9 [2] : vector<8x8x64xf32> to vector<8x8xf32>
    %c0_10 = arith.constant 0 : index
    %c0_11 = arith.constant 0 : index
    %15 = memref.load %arg5[%c0_10, %c0_11] : memref<1x1xf32, #tpu.memory_space<smem>>
    %16 = vector.broadcast %15 : f32 to vector<8x8xf32>
    %17 = arith.addf %14, %16 : vector<8x8xf32>
    %cst_12 = arith.constant dense<0xFF800000> : vector<8xf32>
    %18 = vector.multi_reduction <maximumf>, %17, %cst_12 [1] : vector<8x8xf32> to vector<8xf32>
    %19 = vector.shape_cast %18 : vector<8xf32> to vector<8x1xf32>
    %20 = vector.broadcast %19 : vector<8x1xf32> to vector<8x8xf32>
    %21 = arith.subf %17, %20 : vector<8x8xf32>
    %22 = math.exp %21 : vector<8x8xf32>
    %cst_13 = arith.constant dense<0.000000e+00> : vector<8xf32>
    %23 = vector.multi_reduction <add>, %22, %cst_13 [1] : vector<8x8xf32> to vector<8xf32>
    %24 = vector.shape_cast %23 : vector<8xf32> to vector<8x1xf32>
    %25 = vector.broadcast %24 : vector<8x1xf32> to vector<8x8xf32>
    %26 = arith.divf %22, %25 : vector<8x8xf32>
    %27 = vector.shape_cast %26 : vector<8x8xf32> to vector<8x8x1xf32>
    %28 = vector.broadcast %27 : vector<8x8x1xf32> to vector<8x8x32xf32>
    %29 = arith.mulf %0, %28 : vector<8x8x32xf32>
    %cst_14 = arith.constant dense<0.000000e+00> : vector<8x32xf32>
    %30 = vector.multi_reduction <add>, %29, %cst_14 [1] : vector<8x8x32xf32> to vector<8x32xf32>
    %c0_15 = arith.constant 0 : index
    %c0_16 = arith.constant 0 : index
    %31 = vector.load %arg6[%c0_15, %c0_16] : memref<8x32xf32, #tpu.memory_space<vmem>>, vector<8x32xf32>
    tpu.vector_store %arg6[%c0_15, %c0_16], %30 {strides = array<i32>} : memref<8x32xf32, #tpu.memory_space<vmem>>, vector<8x32xf32>,
    %c0_17 = arith.constant 0 : index
    %c0_18 = arith.constant 0 : index
    %32 = vector.load %arg7[%c0_17, %c0_18] : memref<8x8xf32, #tpu.memory_space<vmem>>, vector<8x8xf32>
    tpu.vector_store %arg7[%c0_17, %c0_18], %26 {strides = array<i32>} : memref<8x8xf32, #tpu.memory_space<vmem>>, vector<8x8xf32>,
    return
  }
  func.func @transform_0(%arg0: i32) -> (i32, i32, i32) {
    %c0_i32 = arith.constant 0 : i32
    %c0_i32_0 = arith.constant 0 : i32
    %c0_i32_1 = arith.constant 0 : i32
    return %arg0, %c0_i32, %c0_i32_0 : i32, i32, i32
  }
  func.func @transform_1(%arg0: i32) -> (i32, i32) {
    %c0_i32 = arith.constant 0 : i32
    %c0_i32_0 = arith.constant 0 : i32
    %c0_i32_1 = arith.constant 0 : i32
    return %c0_i32, %c0_i32_0 : i32, i32
  }
  func.func @transform_2(%arg0: i32) -> (i32, i32) {
    %c0_i32 = arith.constant 0 : i32
    %c0_i32_0 = arith.constant 0 : i32
    %c0_i32_1 = arith.constant 0 : i32
    return %c0_i32, %c0_i32_0 : i32, i32
  }
  func.func @transform_3(%arg0: i32) -> (i32, i32) {
    %c0_i32 = arith.constant 0 : i32
    %c0_i32_0 = arith.constant 0 : i32
    %c0_i32_1 = arith.constant 0 : i32
    return %c0_i32, %c0_i32_0 : i32, i32
  }
  func.func @transform_4(%arg0: i32) -> (i32, i32) {
    %c0_i32 = arith.constant 0 : i32
    %c0_i32_0 = arith.constant 0 : i32
    %c0_i32_1 = arith.constant 0 : i32
    return %c0_i32, %c0_i32_0 : i32, i32
  }
  func.func @transform_5(%arg0: i32) -> (i32, i32) {
    %c0_i32 = arith.constant 0 : i32
    %c0_i32_0 = arith.constant 0 : i32
    return %arg0, %c0_i32 : i32, i32
  }
  func.func @transform_6(%arg0: i32) -> (i32, i32) {
    %c0_i32 = arith.constant 0 : i32
    %c0_i32_0 = arith.constant 0 : i32
    return %arg0, %c0_i32 : i32, i32
  }
}

</mosaic_0001>

<llo_original>
// kernel: tpu_custom_call.1
$region0: #{tpu_custom_call.1}
  #allocation0 [shape = 'u32[]', space=smem, size = 0x4, offset = 0x4, fixed_abs, tag = 'smem constant byte address 0x4 - core index']
  #allocation1 [shape = 'u32[72,128]{1,0:T(1,128)}', space=vmem, size = 0x9000, scoped, tag = 'internal scratch']
  #allocation2 [shape = 'f32[1,1]{1,0:T(1,128)S(6)}', space=smem, size = 0x200, scoped, tag = 'scoped memory for tpu_custom_call.1']
  %s0 = inlined_call_operand.hbm [shape: f32[8,8,32], index: 0, kind: input, shape index: {}]
  %s1 = inlined_call_operand.hbm [shape: f32[32,64], index: 1, kind: input, shape index: {}]
  %s2 = inlined_call_operand.vmem [shape: f32[1,64], index: 2, kind: input, shape index: {}]
  %s3 = inlined_call_operand.vmem [shape: f32[1,64], index: 3, kind: input, shape index: {}]
  %s4 = inlined_call_operand.<no memory space> [shape: f32[1,1], index: 4, kind: input, shape index: {}]
  %s5 = inlined_call_operand.hbm [shape: f32[8,32], index: 5, kind: output, shape index: {0}]
  %s6 = inlined_call_operand.hbm [shape: f32[8,8], index: 6, kind: output, shape index: {1}]
  %7 = xla_tuple %s5, %s6
  %s8 = sld [smem:[#allocation0]]
  $region46: #{tpu_custom_call.1} parent=0
    _
  %s10 = ssub.s32 1, %s8
  %s11 = scalar_select 0, %s10, %s8
  %12 = sst [smem:[#allocation2]] %s4
  $region1: #{tpu_custom_call.1} parent=0
    #allocation3 [shape = 'u8[32768]{0}', space=vmem, size = 0x8000, scoped, tag = 'input window, operand 0, single buffered']
    #allocation4 [shape = 's32[1]{0}', space=sflag, size = 0x4, scoped, tag = 'scoped memory for tpu_custom_call.1']
    #allocation5 [shape = 's32[1]{0}', space=sflag, size = 0x4, scoped, tag = 'scoped memory for tpu_custom_call.1']
    #allocation6 [shape = 'u8[16384]{0}', space=vmem, size = 0x4000, scoped, tag = 'input window, operand 1, single buffered']
    #allocation7 [shape = 's32[1]{0}', space=sflag, size = 0x4, scoped, tag = 'scoped memory for tpu_custom_call.1']
    #allocation8 [shape = 'u8[4096]{0}', space=vmem, size = 0x1000, scoped, tag = 'output window, operand 0, single buffered']
    #allocation9 [shape = 'u8[4096]{0}', space=vmem, size = 0x1000, scoped, tag = 'output window, operand 1, single buffered']
    #allocation10 [shape = 's32[1]{0}', space=sflag, size = 0x4, scoped, tag = 'scoped memory for tpu_custom_call.1']
    %13 = vsyncpa [#allocation4], 0
    %14 = vsyncpa [#allocation7], 0
    %15 = vsyncpa [#allocation5], 0
    %16 = vsyncpa [#allocation10], 0
    // Predicated region
    $region2: #{tpu_custom_call.1} parent=1 // pred_check
      _
    $region3: #{tpu_custom_call.1} parent=1 // pred_check_branch
      %18 = sbr.rel (0) target = $region5
    $region4: #{tpu_custom_call.1} parent=1 // pred_region
      %20 = vsyncadd [#allocation4], 0
      %s21 = sshll.u32 %s0, 4
      %s22 = int_to_ptr.hbm [resolvable:$true] %s21
      %s23 = sshll.u32 [#allocation3], 4
      %s24 = int_to_ptr.vmem [resolvable:$true] %s23
      %29 = dma.hbm_to_vmem [thread:$0]  %s22, 1024, %s24, [#allocation4], 128, 128, 8
    $region5: #{tpu_custom_call.1} parent=1 // pred_fallthru
      _
    // Predicated region
    $region6: #{tpu_custom_call.1} parent=1 // pred_check
      _
    $region7: #{tpu_custom_call.1} parent=1 // pred_check_branch
      %31 = sbr.rel (0) target = $region9
    $region8: #{tpu_custom_call.1} parent=1 // pred_region
      %33 = vsyncadd [#allocation7], 0
      %s34 = sshll.u32 %s1, 4
      %s35 = int_to_ptr.hbm [resolvable:$true] %s34
      %s36 = sshll.u32 [#allocation6], 4
      %s37 = int_to_ptr.vmem [resolvable:$true] %s36
      %42 = dma.hbm_to_vmem [thread:$0]  %s35, 512, %s37, [#allocation7], 128, 128, 8
    $region9: #{tpu_custom_call.1} parent=1 // pred_fallthru
      _
    // Predicated region
    $region10: #{tpu_custom_call.1} parent=1 // pred_check
      _
    $region11: #{tpu_custom_call.1} parent=1 // pred_check_branch
      %44 = sbr.rel (0) target = $region13
    $region12: #{tpu_custom_call.1} parent=1 // pred_region
      _
    $region13: #{tpu_custom_call.1} parent=1 // pred_fallthru
      _
    // Predicated region
    $region14: #{tpu_custom_call.1} parent=1 // pred_check
      _
    $region15: #{tpu_custom_call.1} parent=1 // pred_check_branch
      %46 = sbr.rel (0) target = $region17
    $region16: #{tpu_custom_call.1} parent=1 // pred_region
      _
    $region17: #{tpu_custom_call.1} parent=1 // pred_fallthru
      _
    // Predicated region
    $region18: #{tpu_custom_call.1} parent=1 // pred_check
      _
    $region19: #{tpu_custom_call.1} parent=1 // pred_check_branch
      %48 = sbr.rel (0) target = $region21
    $region20: #{tpu_custom_call.1} parent=1 // pred_region
      _
    $region21: #{tpu_custom_call.1} parent=1 // pred_fallthru
      _
    // Predicated region
    $region22: #{tpu_custom_call.1} parent=1 // pred_check
      _
    $region23: #{tpu_custom_call.1} parent=1 // pred_check_branch
      %50 = sbr.rel (0) target = $region25
    $region24: #{tpu_custom_call.1} parent=1 // pred_region
      %52 = dma.done [#allocation4], 1024
    $region25: #{tpu_custom_call.1} parent=1 // pred_fallthru
      _
    // Predicated region
    $region26: #{tpu_custom_call.1} parent=1 // pred_check
      _
    $region27: #{tpu_custom_call.1} parent=1 // pred_check_branch
      %54 = sbr.rel (0) target = $region29
    $region28: #{tpu_custom_call.1} parent=1 // pred_region
      %56 = dma.done [#allocation7], 512
    $region29: #{tpu_custom_call.1} parent=1 // pred_fallthru
      _
    %v57 = vld [vmem:[#allocation3] sm:$0xff]
    %v58 = vld [vmem:[#allocation3 + $0x8] sm:$0xff]
    %v59 = vld [vmem:[#allocation3 + $0x10] sm:$0xff]
    %v60 = vld [vmem:[#allocation3 + $0x18] sm:$0xff]
    %v61 = vld [vmem:[#allocation3 + $0x20] sm:$0xff]
    %v62 = vld [vmem:[#allocation3 + $0x28] sm:$0xff]
    %v63 = vld [vmem:[#allocation3 + $0x30] sm:$0xff]
    %v64 = vld [vmem:[#allocation3 + $0x38] sm:$0xff]
    %v65 = vld [vmem:[#allocation6] sm:$0xff]
    %v66 = vld [vmem:[#allocation6 + $0x8] sm:$0xff]
    %v67 = vld [vmem:[#allocation6 + $0x10] sm:$0xff]
    %v68 = vld [vmem:[#allocation6 + $0x18] sm:$0xff]
    %v69 = vld [vmem:[%s2] sm:$0x1]
    %v71 = vperm.slane %v69, 0
    %vm73 = vcmask 261120
    %v75 = vsel %vm73, %v57, 0
    %v78 = vsel %vm73, %v58, 0
    %v81 = vsel %vm73, %v59, 0
    %v84 = vsel %vm73, %v60, 0
    %v87 = vsel %vm73, %v61, 0
    %v90 = vsel %vm73, %v62, 0
    %v93 = vsel %vm73, %v63, 0
    %v96 = vsel %vm73, %v64, 0
    %98 = vmatpush.msra.mxu0 0.0
    %99 = vmatpush.msra.mxu0 0.0
    %100 = vmatpush.msra.mxu0 0.0
    %101 = vmatpush.msra.mxu0 0.0
    %102 = vmatpush.msra.mxu0 0.0
    %103 = vmatpush.msra.mxu0 0.0
    %104 = vmatpush.msra.mxu0 0.0
    %105 = vmatpush.msra.mxu0 0.0
    %106 = vmatpush.msra.mxu0 0.0
    %107 = vmatpush.msra.mxu0 0.0
    %108 = vmatpush.msra.mxu0 0.0
    %109 = vmatpush.msra.mxu0 0.0
    %110 = vmatpush.msra.mxu0 %v68
    %111 = vmatpush.msra.mxu0 %v67
    %112 = vmatpush.msra.mxu0 %v66
    %113 = vmatpush.msra.mxu0 %v65
    %114 = vmatmul.f32.gmra.mxu0 %v75
    %v115 = vpop.f32.mrf.mxu0
    %v116 = vadd.f32 %v71, %v115
    %117 = vmatmul.f32.gmra.mxu0 %v78
    %v118 = vpop.f32.mrf.mxu0
    %v119 = vadd.f32 %v71, %v118
    %120 = vmatmul.f32.gmra.mxu0 %v81
    %v121 = vpop.f32.mrf.mxu0
    %v122 = vadd.f32 %v71, %v121
    %123 = vmatmul.f32.gmra.mxu0 %v84
    %v124 = vpop.f32.mrf.mxu0
    %v125 = vadd.f32 %v71, %v124
    %126 = vmatmul.f32.gmra.mxu0 %v87
    %v127 = vpop.f32.mrf.mxu0
    %v128 = vadd.f32 %v71, %v127
    %129 = vmatmul.f32.gmra.mxu0 %v90
    %v130 = vpop.f32.mrf.mxu0
    %v131 = vadd.f32 %v71, %v130
    %132 = vmatmul.f32.gmra.mxu0 %v93
    %v133 = vpop.f32.mrf.mxu0
    %v134 = vadd.f32 %v71, %v133
    %135 = vmatmul.f32.gmra.mxu0 %v96
    %v136 = vpop.f32.mrf.mxu0
    %v137 = vadd.f32 %v71, %v136
    %138 = vdwg.mxu0
    %v139 = vmax.f32 %v116, 0.0
    %v140 = vmax.f32 %v119, 0.0
    %v141 = vmax.f32 %v122, 0.0
    %v142 = vmax.f32 %v125, 0.0
    %v143 = vmax.f32 %v128, 0.0
    %v144 = vmax.f32 %v131, 0.0
    %v145 = vmax.f32 %v134, 0.0
    %v146 = vmax.f32 %v137, 0.0
    %v147 = vld [vmem:[%s3] sm:$0x1]
    %v149 = vperm.slane %v147, 0
    %v151 = vmul.f32 %v139, %v149
    %v152 = vmul.f32 %v140, %v149
    %v153 = vmul.f32 %v141, %v149
    %v154 = vmul.f32 %v142, %v149
    %v155 = vmul.f32 %v143, %v149
    %v156 = vmul.f32 %v144, %v149
    %v157 = vmul.f32 %v145, %v149
    %v158 = vmul.f32 %v146, %v149
    %vm159 = vcmask 523264
    %v160 = vsel %vm159, %v151, 0.0
    %161 = vadd.xlane.f32.xlu0 %v160
    %v162 = vpop.xlane.xlu0 %161
    %v163 = vsel %vm159, %v152, 0.0
    %164 = vadd.xlane.f32.xlu0 %v163
    %v165 = vpop.xlane.xlu0 %164
    %v166 = vsel %vm159, %v153, 0.0
    %167 = vadd.xlane.f32.xlu0 %v166
    %v168 = vpop.xlane.xlu0 %167
    %v169 = vsel %vm159, %v154, 0.0
    %170 = vadd.xlane.f32.xlu0 %v169
    %v171 = vpop.xlane.xlu0 %170
    %v172 = vsel %vm159, %v155, 0.0
    %173 = vadd.xlane.f32.xlu0 %v172
    %v174 = vpop.xlane.xlu0 %173
    %v175 = vsel %vm159, %v156, 0.0
    %176 = vadd.xlane.f32.xlu0 %v175
    %v177 = vpop.xlane.xlu0 %176
    %v178 = vsel %vm159, %v157, 0.0
    %179 = vadd.xlane.f32.xlu0 %v178
    %v180 = vpop.xlane.xlu0 %179
    %v181 = vsel %vm159, %v158, 0.0
    %182 = vadd.xlane.f32.xlu0 %v181
    %v183 = vpop.xlane.xlu0 %182
    %s184 = sld [smem:[#allocation2]]
    %v185 = vstv %s184
    %v186 = vadd.f32 %v162, %v185
    %v187 = vadd.f32 %v165, %v185
    %v188 = vadd.f32 %v168, %v185
    %v189 = vadd.f32 %v171, %v185
    %v190 = vadd.f32 %v174, %v185
    %v191 = vadd.f32 %v177, %v185
    %v192 = vadd.f32 %v180, %v185
    %v193 = vadd.f32 %v183, %v185
    %v202 = vlaneseq
    %v203 = vand.u32 %v202, 127
    %v204 = vperm.slane %v186, %v203
    %v205 = vperm.slane %v187, %v203
    %v206 = vperm.slane %v188, %v203
    %v207 = vperm.slane %v189, %v203
    %v208 = vperm.slane %v190, %v203
    %v209 = vperm.slane %v191, %v203
    %v210 = vperm.slane %v192, %v203
    %v211 = vperm.slane %v193, %v203
    %vm212 = vcmask 1041409
    %v213 = vsel %vm212, %v205, %v204
    %vm214 = vcmask 1042434
    %v215 = vsel %vm214, %v206, %v213
    %vm216 = vcmask 1043459
    %v217 = vsel %vm216, %v207, %v215
    %vm218 = vcmask 1044484
    %v219 = vsel %vm218, %v208, %v217
    %vm220 = vcmask 1045509
    %v221 = vsel %vm220, %v209, %v219
    %vm222 = vcmask 1046534
    %v223 = vsel %vm222, %v210, %v221
    %vm224 = vcmask 1047559
    %v225 = vsel %vm224, %v211, %v223
    %vm227 = vcmask 64512
    %v228 = vsel %vm227, %v225, -inf
    %229 = vmax.xlane.f32.xlu0 %v228
    %v230 = vpop.xlane.xlu0 %229
    %v232 = vperm.slane %v230, 0
    %v233 = vperm.slane %v230, 1
    %v234 = vperm.slane %v230, 2
    %v235 = vperm.slane %v230, 3
    %v236 = vperm.slane %v230, 4
    %v237 = vperm.slane %v230, 5
    %v238 = vperm.slane %v230, 6
    %v239 = vperm.slane %v230, 7
    %v248 = vsub.f32 %v186, %v232
    %v249 = vsub.f32 %v187, %v233
    %v250 = vsub.f32 %v188, %v234
    %v251 = vsub.f32 %v189, %v235
    %v252 = vsub.f32 %v190, %v236
    %v253 = vsub.f32 %v191, %v237
    %v254 = vsub.f32 %v192, %v238
    %v255 = vsub.f32 %v193, %v239
    %v256 = vmul.f32 %v248, 1.442695
    %v257 = vpow.pop %v256
    %v258 = vmul.f32 %v249, 1.442695
    %v259 = vpow.pop %v258
    %v260 = vmul.f32 %v250, 1.442695
    %v261 = vpow.pop %v260
    %v262 = vmul.f32 %v251, 1.442695
    %v263 = vpow.pop %v262
    %v264 = vmul.f32 %v252, 1.442695
    %v265 = vpow.pop %v264
    %v266 = vmul.f32 %v253, 1.442695
    %v267 = vpow.pop %v266
    %v268 = vmul.f32 %v254, 1.442695
    %v269 = vpow.pop %v268
    %v270 = vmul.f32 %v255, 1.442695
    %v271 = vpow.pop %v270
    %280 = vset.pattern.permute.xlu0 0
    %281 = vperm.xlu0 %280, %v257
    %v282 = vpop.permute.xlu0 %281
    %283 = vset.pattern.permute.xlu0 0
    %284 = vperm.xlu0 %283, %v259
    %v285 = vpop.permute.xlu0 %284
    %286 = vset.pattern.permute.xlu0 0
    %287 = vperm.xlu0 %286, %v261
    %v288 = vpop.permute.xlu0 %287
    %289 = vset.pattern.permute.xlu0 0
    %290 = vperm.xlu0 %289, %v263
    %v291 = vpop.permute.xlu0 %290
    %292 = vset.pattern.permute.xlu0 0
    %293 = vperm.xlu0 %292, %v265
    %v294 = vpop.permute.xlu0 %293
    %295 = vset.pattern.permute.xlu0 0
    %296 = vperm.xlu0 %295, %v267
    %v297 = vpop.permute.xlu0 %296
    %298 = vset.pattern.permute.xlu0 0
    %299 = vperm.xlu0 %298, %v269
    %v300 = vpop.permute.xlu0 %299
    %301 = vset.pattern.permute.xlu0 0
    %302 = vperm.xlu0 %301, %v271
    %v303 = vpop.permute.xlu0 %302
    %v304 = vperm.slane %v282, %v203
    %v305 = vperm.slane %v285, %v203
    %v306 = vperm.slane %v288, %v203
    %v307 = vperm.slane %v291, %v203
    %v308 = vperm.slane %v294, %v203
    %v309 = vperm.slane %v297, %v203
    %v310 = vperm.slane %v300, %v203
    %v311 = vperm.slane %v303, %v203
    %v312 = vsel %vm212, %v305, %v304
    %v313 = vsel %vm214, %v306, %v312
    %v314 = vsel %vm216, %v307, %v313
    %v315 = vsel %vm218, %v308, %v314
    %v316 = vsel %vm220, %v309, %v315
    %v317 = vsel %vm222, %v310, %v316
    %v318 = vsel %vm224, %v311, %v317
    %v320 = vsel %vm227, %v318, 0.0
    %321 = vadd.xlane.f32.xlu0 %v320
    %v322 = vpop.xlane.xlu0 %321
    %v324 = vperm.slane %v322, 0
    %v325 = vperm.slane %v322, 1
    %v326 = vperm.slane %v322, 2
    %v327 = vperm.slane %v322, 3
    %v328 = vperm.slane %v322, 4
    %v329 = vperm.slane %v322, 5
    %v330 = vperm.slane %v322, 6
    %v331 = vperm.slane %v322, 7
    %v340 = vrcp.pop %v324
    %v341 = vmul.f32 %v324, %v340
    %v342 = vsub.f32 1.0, %v341
    %v343 = vmul.f32 %v340, %v342
    %v344 = vadd.f32 %v340, %v343
    %vm345 = vweird.f32 %v324
    %vm346 = vweird.f32 %v340
    %vm347 = vmor %vm345, %vm346
    %v348 = vsel %vm347, %v340, %v344
    %v349 = vand.u32 2147483647, %v324
    %vm350 = vcmp.eq.f32.partialorder %v349, 8.507059e+37
    %v351 = vand.u32 %v324, 2147483648
    %v352 = vor.u32 1.1754944e-38, %v351
    %v353 = vsel %vm350, %v352, %v348
    %v354 = vmul.f32 %v257, %v353
    %v355 = vrcp.pop %v325
    %v356 = vmul.f32 %v325, %v355
    %v357 = vsub.f32 1.0, %v356
    %v358 = vmul.f32 %v355, %v357
    %v359 = vadd.f32 %v355, %v358
    %vm360 = vweird.f32 %v325
    %vm361 = vweird.f32 %v355
    %vm362 = vmor %vm360, %vm361
    %v363 = vsel %vm362, %v355, %v359
    %v364 = vand.u32 2147483647, %v325
    %vm365 = vcmp.eq.f32.partialorder %v364, 8.507059e+37
    %v366 = vand.u32 %v325, 2147483648
    %v367 = vor.u32 1.1754944e-38, %v366
    %v368 = vsel %vm365, %v367, %v363
    %v369 = vmul.f32 %v259, %v368
    %v370 = vrcp.pop %v326
    %v371 = vmul.f32 %v326, %v370
    %v372 = vsub.f32 1.0, %v371
    %v373 = vmul.f32 %v370, %v372
    %v374 = vadd.f32 %v370, %v373
    %vm375 = vweird.f32 %v326
    %vm376 = vweird.f32 %v370
    %vm377 = vmor %vm375, %vm376
    %v378 = vsel %vm377, %v370, %v374
    %v379 = vand.u32 2147483647, %v326
    %vm380 = vcmp.eq.f32.partialorder %v379, 8.507059e+37
    %v381 = vand.u32 %v326, 2147483648
    %v382 = vor.u32 1.1754944e-38, %v381
    %v383 = vsel %vm380, %v382, %v378
    %v384 = vmul.f32 %v261, %v383
    %v385 = vrcp.pop %v327
    %v386 = vmul.f32 %v327, %v385
    %v387 = vsub.f32 1.0, %v386
    %v388 = vmul.f32 %v385, %v387
    %v389 = vadd.f32 %v385, %v388
    %vm390 = vweird.f32 %v327
    %vm391 = vweird.f32 %v385
    %vm392 = vmor %vm390, %vm391
    %v393 = vsel %vm392, %v385, %v389
    %v394 = vand.u32 2147483647, %v327
    %vm395 = vcmp.eq.f32.partialorder %v394, 8.507059e+37
    %v396 = vand.u32 %v327, 2147483648
    %v397 = vor.u32 1.1754944e-38, %v396
    %v398 = vsel %vm395, %v397, %v393
    %v399 = vmul.f32 %v263, %v398
    %v400 = vrcp.pop %v328
    %v401 = vmul.f32 %v328, %v400
    %v402 = vsub.f32 1.0, %v401
    %v403 = vmul.f32 %v400, %v402
    %v404 = vadd.f32 %v400, %v403
    %vm405 = vweird.f32 %v328
    %vm406 = vweird.f32 %v400
    %vm407 = vmor %vm405, %vm406
    %v408 = vsel %vm407, %v400, %v404
    %v409 = vand.u32 2147483647, %v328
    %vm410 = vcmp.eq.f32.partialorder %v409, 8.507059e+37
    %v411 = vand.u32 %v328, 2147483648
    %v412 = vor.u32 1.1754944e-38, %v411
    %v413 = vsel %vm410, %v412, %v408
    %v414 = vmul.f32 %v265, %v413
    %v415 = vrcp.pop %v329
    %v416 = vmul.f32 %v329, %v415
    %v417 = vsub.f32 1.0, %v416
    %v418 = vmul.f32 %v415, %v417
    %v419 = vadd.f32 %v415, %v418
    %vm420 = vweird.f32 %v329
    %vm421 = vweird.f32 %v415
    %vm422 = vmor %vm420, %vm421
    %v423 = vsel %vm422, %v415, %v419
    %v424 = vand.u32 2147483647, %v329
    %vm425 = vcmp.eq.f32.partialorder %v424, 8.507059e+37
    %v426 = vand.u32 %v329, 2147483648
    %v427 = vor.u32 1.1754944e-38, %v426
    %v428 = vsel %vm425, %v427, %v423
    %v429 = vmul.f32 %v267, %v428
    %v430 = vrcp.pop %v330
    %v431 = vmul.f32 %v330, %v430
    %v432 = vsub.f32 1.0, %v431
    %v433 = vmul.f32 %v430, %v432
    %v434 = vadd.f32 %v430, %v433
    %vm435 = vweird.f32 %v330
    %vm436 = vweird.f32 %v430
    %vm437 = vmor %vm435, %vm436
    %v438 = vsel %vm437, %v430, %v434
    %v439 = vand.u32 2147483647, %v330
    %vm440 = vcmp.eq.f32.partialorder %v439, 8.507059e+37
    %v441 = vand.u32 %v330, 2147483648
    %v442 = vor.u32 1.1754944e-38, %v441
    %v443 = vsel %vm440, %v442, %v438
    %v444 = vmul.f32 %v269, %v443
    %v445 = vrcp.pop %v331
    %v446 = vmul.f32 %v331, %v445
    %v447 = vsub.f32 1.0, %v446
    %v448 = vmul.f32 %v445, %v447
    %v449 = vadd.f32 %v445, %v448
    %vm450 = vweird.f32 %v331
    %vm451 = vweird.f32 %v445
    %vm452 = vmor %vm450, %vm451
    %v453 = vsel %vm452, %v445, %v449
    %v454 = vand.u32 2147483647, %v331
    %vm455 = vcmp.eq.f32.partialorder %v454, 8.507059e+37
    %v456 = vand.u32 %v331, 2147483648
    %v457 = vor.u32 1.1754944e-38, %v456
    %v458 = vsel %vm455, %v457, %v453
    %v459 = vmul.f32 %v271, %v458
    %461 = vset.pattern.permute.xlu0 0
    %462 = vperm.xlu0 %461, %v354
    %v463 = vpop.permute.xlu0 %462
    %466 = vset.pattern.permute.xlu0 0
    %467 = vperm.xlu0 %466, %v369
    %v468 = vpop.permute.xlu0 %467
    %471 = vset.pattern.permute.xlu0 0
    %472 = vperm.xlu0 %471, %v384
    %v473 = vpop.permute.xlu0 %472
    %476 = vset.pattern.permute.xlu0 0
    %477 = vperm.xlu0 %476, %v399
    %v478 = vpop.permute.xlu0 %477
    %481 = vset.pattern.permute.xlu0 0
    %482 = vperm.xlu0 %481, %v414
    %v483 = vpop.permute.xlu0 %482
    %486 = vset.pattern.permute.xlu0 0
    %487 = vperm.xlu0 %486, %v429
    %v488 = vpop.permute.xlu0 %487
    %491 = vset.pattern.permute.xlu0 0
    %492 = vperm.xlu0 %491, %v444
    %v493 = vpop.permute.xlu0 %492
    %496 = vset.pattern.permute.xlu0 0
    %497 = vperm.xlu0 %496, %v459
    %v498 = vpop.permute.xlu0 %497
    %v500 = vmul.f32 %v57, %v463
    %v501 = vmul.f32 %v58, %v468
    %v502 = vmul.f32 %v59, %v473
    %v503 = vmul.f32 %v60, %v478
    %v504 = vmul.f32 %v61, %v483
    %v505 = vmul.f32 %v62, %v488
    %v506 = vmul.f32 %v63, %v493
    %v507 = vmul.f32 %v64, %v498
    %v508 = vsel %vm73, %v500, 0.0
    %v509 = vrot.slane %v508, 4
    %v510 = vadd.f32 %v508, %v509
    %v511 = vrot.slane %v510, 2
    %v512 = vadd.f32 %v510, %v511
    %v513 = vrot.slane %v512, 1
    %v514 = vadd.f32 %v512, %v513
    %v515 = vsel %vm73, %v501, 0.0
    %v516 = vrot.slane %v515, 4
    %v517 = vadd.f32 %v515, %v516
    %v518 = vrot.slane %v517, 2
    %v519 = vadd.f32 %v517, %v518
    %v520 = vrot.slane %v519, 1
    %v521 = vadd.f32 %v519, %v520
    %v522 = vsel %vm73, %v502, 0.0
    %v523 = vrot.slane %v522, 4
    %v524 = vadd.f32 %v522, %v523
    %v525 = vrot.slane %v524, 2
    %v526 = vadd.f32 %v524, %v525
    %v527 = vrot.slane %v526, 1
    %v528 = vadd.f32 %v526, %v527
    %v529 = vsel %vm73, %v503, 0.0
    %v530 = vrot.slane %v529, 4
    %v531 = vadd.f32 %v529, %v530
    %v532 = vrot.slane %v531, 2
    %v533 = vadd.f32 %v531, %v532
    %v534 = vrot.slane %v533, 1
    %v535 = vadd.f32 %v533, %v534
    %v536 = vsel %vm73, %v504, 0.0
    %v537 = vrot.slane %v536, 4
    %v538 = vadd.f32 %v536, %v537
    %v539 = vrot.slane %v538, 2
    %v540 = vadd.f32 %v538, %v539
    %v541 = vrot.slane %v540, 1
    %v542 = vadd.f32 %v540, %v541
    %v543 = vsel %vm73, %v505, 0.0
    %v544 = vrot.slane %v543, 4
    %v545 = vadd.f32 %v543, %v544
    %v546 = vrot.slane %v545, 2
    %v547 = vadd.f32 %v545, %v546
    %v548 = vrot.slane %v547, 1
    %v549 = vadd.f32 %v547, %v548
    %v550 = vsel %vm73, %v506, 0.0
    %v551 = vrot.slane %v550, 4
    %v552 = vadd.f32 %v550, %v551
    %v553 = vrot.slane %v552, 2
    %v554 = vadd.f32 %v552, %v553
    %v555 = vrot.slane %v554, 1
    %v556 = vadd.f32 %v554, %v555
    %v557 = vsel %vm73, %v507, 0.0
    %v558 = vrot.slane %v557, 4
    %v559 = vadd.f32 %v557, %v558
    %v560 = vrot.slane %v559, 2
    %v561 = vadd.f32 %v559, %v560
    %v562 = vrot.slane %v561, 1
    %v563 = vadd.f32 %v561, %v562
    %v572 = vsel %vm212, %v521, %v514
    %v573 = vsel %vm214, %v528, %v572
    %v574 = vsel %vm216, %v535, %v573
    %v575 = vsel %vm218, %v542, %v574
    %v576 = vsel %vm220, %v549, %v575
    %v577 = vsel %vm222, %v556, %v576
    %v578 = vsel %vm224, %v563, %v577
    %580 = vst.msk [vmem:[#allocation8] sm:$0xff] %vm73, %v578
    %v581 = vperm.slane %v463, %v203
    %v582 = vperm.slane %v468, %v203
    %v583 = vperm.slane %v473, %v203
    %v584 = vperm.slane %v478, %v203
    %v585 = vperm.slane %v483, %v203
    %v586 = vperm.slane %v488, %v203
    %v587 = vperm.slane %v493, %v203
    %v588 = vperm.slane %v498, %v203
    %v589 = vsel %vm212, %v582, %v581
    %v590 = vsel %vm214, %v583, %v589
    %v591 = vsel %vm216, %v584, %v590
    %v592 = vsel %vm218, %v585, %v591
    %v593 = vsel %vm220, %v586, %v592
    %v594 = vsel %vm222, %v587, %v593
    %v595 = vsel %vm224, %v588, %v594
    %597 = vst.msk [vmem:[#allocation9] sm:$0xff] %vm227, %v595
    // Predicated region
    $region30: #{tpu_custom_call.1} parent=1 // pred_check
      _
    $region31: #{tpu_custom_call.1} parent=1 // pred_check_branch
      %599 = sbr.rel (0) target = $region33
    $region32: #{tpu_custom_call.1} parent=1 // pred_region
      %601 = vsyncadd [#allocation5], 0
      %s603 = sshll.u32 [#allocation8], 4
      %s604 = int_to_ptr.vmem [resolvable:$true] %s603
      %s605 = sshll.u32 %s5, 4
      %s606 = int_to_ptr.hbm [resolvable:$true] %s605
      %608 = dma.vmem_to_hbm [thread:$0]  %s604, 128, %s606, [#allocation5]
    $region33: #{tpu_custom_call.1} parent=1 // pred_fallthru
      _
    // Predicated region
    $region34: #{tpu_custom_call.1} parent=1 // pred_check
      _
    $region35: #{tpu_custom_call.1} parent=1 // pred_check_branch
      %610 = sbr.rel (0) target = $region37
    $region36: #{tpu_custom_call.1} parent=1 // pred_region
      %612 = vsyncadd [#allocation10], 0
      %s614 = sshll.u32 [#allocation9], 4
      %s615 = int_to_ptr.vmem [resolvable:$true] %s614
      %s616 = sshll.u32 %s6, 4
      %s617 = int_to_ptr.hbm [resolvable:$true] %s616
      %619 = dma.vmem_to_hbm [thread:$0]  %s615, 128, %s617, [#allocation10]
    $region37: #{tpu_custom_call.1} parent=1 // pred_fallthru
      _
    // Predicated region
    $region38: #{tpu_custom_call.1} parent=1 // pred_check
      _
    $region39: #{tpu_custom_call.1} parent=1 // pred_check_branch
      %621 = sbr.rel (0) target = $region41
    $region40: #{tpu_custom_call.1} parent=1 // pred_region
      %623 = dma.done [#allocation5], 128
    $region41: #{tpu_custom_call.1} parent=1 // pred_fallthru
      _
    // Predicated region
    $region42: #{tpu_custom_call.1} parent=1 // pred_check
      _
    $region43: #{tpu_custom_call.1} parent=1 // pred_check_branch
      %625 = sbr.rel (0) target = $region45
    $region44: #{tpu_custom_call.1} parent=1 // pred_region
      %627 = dma.done [#allocation10], 128
    $region45: #{tpu_custom_call.1} parent=1 // pred_fallthru
      _
    %628 = vsyncpa [#allocation4], 1
    %629 = vsyncpa [#allocation7], 1
    %630 = vsyncpa [#allocation5], 1
    %631 = vsyncpa [#allocation10], 1

</llo_original>
